<compile_context>
chip_gen: v7x
topology: tpu7x:2x2x1
jax: 0.10.0
libtpu: 0.0.40
codegen_flags: <defaults>
</compile_context>

<pallas_src>
import functools

import jax
import jax.numpy as jnp
from jax import lax
from jax.experimental import pallas as pl
from jax.experimental.pallas import tpu as pltpu


def _round_up(x, m):
    return ((x + m - 1) // m) * m


@functools.lru_cache(maxsize=None)
def _vmem_limit_bytes():
    """Scoped-VMEM budget: ~half of physical, capped at 64 MiB.

    v5e/v6e (128 MiB physical) -> 64 MiB; v7x (64 MiB physical) -> 32 MiB."""
    try:
        cap = int(pltpu.get_tpu_info().vmem_capacity_bytes)
    except Exception:   # conservative fallback if the query is unavailable
        cap = 64 * 1024 * 1024
    return int(min(64 * 1024 * 1024, max(32 * 1024 * 1024, cap // 2)))


# ----------------------------------------------------------------------------
# Pallas GEMM kernels with fused bias + optional ReLU epilogue.
# ----------------------------------------------------------------------------
def _gemm_bias_act_kernel(a_ref, b_ref, bias_ref, o_ref, *, apply_relu):
    """Single-shot GEMM (no K loop, no accumulator scratch)."""
    out = jnp.dot(a_ref[...], b_ref[...], preferred_element_type=jnp.float32)
    out = out + bias_ref[...].astype(jnp.float32)
    if apply_relu:
        out = jnp.maximum(out, 0.0)
    o_ref[...] = out.astype(o_ref.dtype)


def _gemm_acc_kernel(a_ref, b_ref, bias_ref, o_ref, acc_ref, *, apply_relu):
    """K-tiled GEMM with f32 VMEM accumulator; bias+ReLU fused on last k-step."""
    k = pl.program_id(2)
    prod = jnp.dot(a_ref[...], b_ref[...], preferred_element_type=jnp.float32)

    @pl.when(k == 0)
    def _():
        acc_ref[...] = prod                 # first k-step writes (no zero+add)

    @pl.when(k > 0)
    def _():
        acc_ref[...] += prod

    @pl.when(k == pl.num_programs(2) - 1)
    def _():
        out = acc_ref[...] + bias_ref[...].astype(jnp.float32)
        if apply_relu:
            out = jnp.maximum(out, 0.0)
        o_ref[...] = out.astype(o_ref.dtype)


def _fit_tile(dim, cap, align):
    """Largest tile <= cap (halving) that divides round_up(dim, align)."""
    dp = _round_up(dim, align)
    t = cap
    while t > align and dp % t != 0:
        t //= 2
    return min(t, dp)


def _pick_tiles(M, K, N):
    """Shape-adaptive MXU tiles.  GEMV/FC path streams wide weight blocks
    (tn<=1024, tk<=2048 -> ~8 MiB double-buffered weight stream, v7x-safe);
    conv-shaped GEMMs use 256-aligned tn for the 256-wide MXUs."""
    if M <= 16:
        tm = 16                               # bf16-native (16,128) packing
        tn = _fit_tile(N, 1024, 128)
        tk = _fit_tile(K, 2048, 128)
    else:
        tm = _fit_tile(M, 256, 16)
        tn = _fit_tile(N, 256, 128)
        tk = _fit_tile(K, 512, 128)
    return tm, tn, tk


_SMALL_GEMM_BYTES = 6 * 1024 * 1024           # whole-problem-in-VMEM threshold


def _matmul_small(a, b, bias2d, bias_on_rows, relu, out_dtype):
    """Whole problem resident in VMEM: one grid-less pallas_call, no padding
    of K/N (full-array blocks are exempt from the (8,128) constraint)."""
    M, K = a.shape
    _, N = b.shape
    m_align = 16 if a.dtype == jnp.bfloat16 else 8
    Mp = _round_up(M, m_align)
    if Mp != M:
        a = jnp.pad(a, ((0, Mp - M), (0, 0)))
        if bias_on_rows and bias2d.shape[0] != 1:
            bias2d = jnp.pad(bias2d, ((0, Mp - M), (0, 0)))
    out = pl.pallas_call(
        functools.partial(_gemm_bias_act_kernel, apply_relu=relu),
        out_shape=jax.ShapeDtypeStruct((Mp, N), out_dtype),
        compiler_params=pltpu.CompilerParams(
            vmem_limit_bytes=_vmem_limit_bytes()),
    )(a, b, bias2d)
    return out[:M] if Mp != M else out


def _matmul_tiled(a, b, bias2d, bias_on_rows, relu, out_dtype):
    """Tiled GEMM for problems too large for a single VMEM block."""
    M, K = a.shape
    _, N = b.shape
    tm, tn, tk = _pick_tiles(M, K, N)
    Mp, Np, Kp = _round_up(M, tm), _round_up(N, tn), _round_up(K, tk)

    if (Mp, Kp) != (M, K):
        a = jnp.pad(a, ((0, Mp - M), (0, Kp - K)))
    if (Kp, Np) != (K, N):
        b = jnp.pad(b, ((0, Kp - K), (0, Np - N)))
    if bias_on_rows:
        if Mp != M:
            bias2d = jnp.pad(bias2d, ((0, Mp - M), (0, 0)))
    else:
        if Np != N:
            bias2d = jnp.pad(bias2d, ((0, 0), (0, Np - N)))

    nk = Kp // tk
    if nk == 1:
        # Single-k-step specialization: no accumulator scratch, direct write.
        grid = (Mp // tm, Np // tn)
        in_specs = [
            pl.BlockSpec((tm, Kp), lambda i, j: (i, 0)),
            pl.BlockSpec((Kp, tn), lambda i, j: (0, j)),
            (pl.BlockSpec((tm, 1), lambda i, j: (i, 0)) if bias_on_rows
             else pl.BlockSpec((1, tn), lambda i, j: (0, j))),
        ]
        out_spec = pl.BlockSpec((tm, tn), lambda i, j: (i, j))
        scratch = []
        kernel = functools.partial(_gemm_bias_act_kernel, apply_relu=relu)
        dims = ("parallel", "parallel")
    else:
        grid = (Mp // tm, Np // tn, nk)
        in_specs = [
            pl.BlockSpec((tm, tk), lambda i, j, k: (i, k)),
            pl.BlockSpec((tk, tn), lambda i, j, k: (k, j)),
            (pl.BlockSpec((tm, 1), lambda i, j, k: (i, 0)) if bias_on_rows
             else pl.BlockSpec((1, tn), lambda i, j, k: (0, j))),
        ]
        out_spec = pl.BlockSpec((tm, tn), lambda i, j, k: (i, j))
        scratch = [pltpu.VMEM((tm, tn), jnp.float32)]
        kernel = functools.partial(_gemm_acc_kernel, apply_relu=relu)
        dims = ("parallel", "parallel", "arbitrary")

    out = pl.pallas_call(
        kernel,
        out_shape=jax.ShapeDtypeStruct((Mp, Np), out_dtype),
        grid_spec=pltpu.PrefetchScalarGridSpec(
            num_scalar_prefetch=0,
            grid=grid,
            in_specs=in_specs,
            out_specs=out_spec,
            scratch_shapes=scratch),
        compiler_params=pltpu.CompilerParams(
            dimension_semantics=dims,
            vmem_limit_bytes=_vmem_limit_bytes()),
    )(a, b, bias2d)
    return out[:M, :N] if (Mp, Np) != (M, N) else out


def matmul_bias_act(a, b, bias=None, relu=False, bias_on_rows=False,
                    out_dtype=jnp.float32):
    """out = a @ b + bias (+ReLU).  a:(M,K), b:(K,N) -> (M,N) in out_dtype.

    Operands are used in their stored dtype (bf16 activations/weights, f32 for
    the final logits layer); accumulation is always f32.  `bias_on_rows`
    selects a per-row bias (conv W@patches orientation) vs per-column (FC)."""
    M, K = a.shape
    K2, N = b.shape
    assert K == K2
    if a.dtype != b.dtype:
        a = a.astype(b.dtype)
    if bias is None:
        bias = jnp.zeros((M if bias_on_rows else N,), jnp.float32)
    bias2d = bias.astype(jnp.float32).reshape((M, 1) if bias_on_rows else (1, N))

    footprint = (M * K * a.dtype.itemsize + K * N * b.dtype.itemsize
                 + 2 * M * N * 4)
    if footprint <= _SMALL_GEMM_BYTES:
        return _matmul_small(a, b, bias2d, bias_on_rows, relu, out_dtype)
    return _matmul_tiled(a, b, bias2d, bias_on_rows, relu, out_dtype)


# ----------------------------------------------------------------------------
# Conv2d (PyTorch semantics): fused patch extraction + Pallas GEMM, W @ patches
# orientation (per-row bias, no transposes).
# ----------------------------------------------------------------------------
def conv2d(x, w_mat, bias, ksize, stride, padding, relu=True,
           out_dtype=jnp.bfloat16):
    """x:(Cin,H,W) bf16, w_mat:(Cout,Cin*k*k) bf16, bias:(Cout,) -> (Cout,Ho,Wo)."""
    Cout = w_mat.shape[0]
    # One fused XLA op builds the (Cin*k*k, Ho, Wo) patch tensor in bf16
    # (channel-major feature order -> matches torch's w.reshape(Cout, -1)).
    patches = lax.conv_general_dilated_patches(
        x[None],
        filter_shape=(ksize, ksize),
        window_strides=(stride, stride),
        padding=((padding, padding), (padding, padding)),
        dimension_numbers=("NCHW", "OIHW", "NCHW"))
    _, Kdim, Ho, Wo = patches.shape
    patches = patches.reshape(Kdim, Ho * Wo)
    out = matmul_bias_act(w_mat, patches, bias, relu=relu,
                          bias_on_rows=True, out_dtype=out_dtype)
    return out.reshape(Cout, Ho, Wo)


def maxpool2d(x, k=3, s=2):
    # glue: PyTorch MaxPool2d(3, 2), floor mode
    init = jnp.asarray(-jnp.inf, dtype=x.dtype)
    return lax.reduce_window(x, init, lax.max, (1, k, k), (1, s, s), "VALID")


def adaptive_avg_pool2d(x, out_hw):
    """PyTorch AdaptiveAvgPool2d semantics (small output -> plain-JAX glue)."""
    C, H, W = x.shape
    oh, ow = out_hw
    if (H, W) == (oh, ow):
        return x
    rows = []
    for i in range(oh):
        h0, h1 = (i * H) // oh, -(-((i + 1) * H) // oh)
        cols = []
        for j in range(ow):
            w0, w1 = (j * W) // ow, -(-((j + 1) * W) // ow)
            cols.append(jnp.mean(x[:, h0:h1, w0:w1], axis=(1, 2)))
        rows.append(jnp.stack(cols, axis=-1))
    return jnp.stack(rows, axis=1)


# ----------------------------------------------------------------------------
# Bilinear resize (transforms.Resize, align_corners=False) as ONE fused Pallas
# kernel: both separable passes run on the VMEM-resident crop.
# TODO(synk): torchvision's default antialias=True low-pass filter for tensor
# downscaling is not implemented (plain bilinear, antialias=False).
# ----------------------------------------------------------------------------
def _resize_matrix(out_size, in_size):
    o = jnp.arange(out_size, dtype=jnp.float32)
    src = (o + 0.5) * (in_size / out_size) - 0.5
    src = jnp.maximum(src, 0.0)            # PyTorch clamps only the negative side
    i0 = jnp.floor(src)
    w1 = src - i0
    i0 = i0.astype(jnp.int32)
    i0c = jnp.clip(i0, 0, in_size - 1)
    i1 = jnp.clip(i0 + 1, 0, in_size - 1)
    return (jax.nn.one_hot(i0c, in_size) * (1.0 - w1)[:, None]
            + jax.nn.one_hot(i1, in_size) * w1[:, None])   # (out, in), f32


def _resize_kernel(x_ref, rh_ref, rwt_ref, o_ref):
    rh = rh_ref[...]                         # (OH, H)  f32
    rwt = rwt_ref[...]                       # (W, OW)  f32
    for c in range(x_ref.shape[0]):          # C = 3, static unroll
        xc = x_ref[c].astype(jnp.float32)    # (H, W)
        t = jnp.dot(xc, rwt, preferred_element_type=jnp.float32)   # (H, OW)
        yc = jnp.dot(rh, t, preferred_element_type=jnp.float32)    # (OH, OW)
        o_ref[c] = yc.astype(o_ref.dtype)


def resize_bilinear(x, out_h, out_w, out_dtype=jnp.bfloat16):
    """x:(C,H,W) f32 -> (C,out_h,out_w) bf16, one pallas_call (no HBM transpose)."""
    C, H, W = x.shape
    rh = _resize_matrix(out_h, H)            # kept f32 for accuracy
    rwt = _resize_matrix(out_w, W).T
    return pl.pallas_call(
        _resize_kernel,
        out_shape=jax.ShapeDtypeStruct((C, out_h, out_w), out_dtype),
        compiler_params=pltpu.CompilerParams(
            vmem_limit_bytes=_vmem_limit_bytes()),
    )(x, rh, rwt)


# ----------------------------------------------------------------------------
# AlexNet-style CNN (torchvision layout).  Two configs: full torchvision sizes
# and a scaled-down demo config so the script runs quickly.
# ----------------------------------------------------------------------------
ALEXNET_FULL_CFG = dict(
    resize=(227, 227),
    conv=[(64, 3, 11, 4, 2), (192, 64, 5, 1, 2), (384, 192, 3, 1, 1),
          (256, 384, 3, 1, 1), (256, 256, 3, 1, 1)],   # (Cout, Cin, k, stride, pad)
    pool_after=(0, 1, 4),
    adaptive=(6, 6),
    fc_hidden=(4096, 4096),
    num_classes=20,
)

ALEXNET_TINY_CFG = dict(          # same topology, scaled down for the demo
    resize=(63, 63),
    conv=[(16, 3, 11, 4, 2), (32, 16, 5, 1, 2), (48, 32, 3, 1, 1),
          (48, 48, 3, 1, 1), (32, 48, 3, 1, 1)],
    pool_after=(0, 1, 4),
    adaptive=(1, 1),
    fc_hidden=(64, 64),
    num_classes=20,
)


def init_alexnet_params(key, cfg):
    # TODO(synk): torchvision pretrained AlexNet weights cannot be loaded here;
    # weights are initialized deterministically from `key` instead.
    conv_cfg = cfg["conv"]
    ah, aw = cfg["adaptive"]
    flat = conv_cfg[-1][0] * ah * aw
    fc_dims = [flat, *cfg["fc_hidden"], cfg["num_classes"]]
    keys = jax.random.split(key, len(conv_cfg) + len(fc_dims) - 1)
    convs, fcs = [], []
    for idx, (co, ci, k, _, _) in enumerate(conv_cfg):
        fan_in = ci * k * k
        w = jax.random.normal(keys[idx], (co, ci, k, k), jnp.float32) / jnp.sqrt(
            jnp.float32(fan_in))
        # Pre-reshape to GEMM orientation + pre-cast to bf16 ONCE at init so
        # the hot path never pays per-call reshape/cast/pad passes.
        convs.append((w.reshape(co, ci * k * k).astype(jnp.bfloat16),
                      jnp.zeros((co,), jnp.float32)))
    n_fc = len(fc_dims) - 1
    for li in range(n_fc):
        din, dout = fc_dims[li], fc_dims[li + 1]
        w = jax.random.normal(keys[len(conv_cfg) + li], (din, dout),
                              jnp.float32) / jnp.sqrt(jnp.float32(din))
        wdtype = jnp.float32 if li == n_fc - 1 else jnp.bfloat16  # final FC in f32
        fcs.append((w.astype(wdtype), jnp.zeros((dout,), jnp.float32)))
    return convs, fcs


def cnn_forward(params, x, cfg):
    """x:(3, rh, rw) bf16 -> logits (num_classes,) f32."""
    convs, fcs = params
    for idx, ((w_mat, b), (_, _, k, s, p)) in enumerate(zip(convs, cfg["conv"])):
        x = conv2d(x, w_mat, b, k, s, p, relu=True)
        if idx in cfg["pool_after"]:
            x = maxpool2d(x)
    x = adaptive_avg_pool2d(x, cfg["adaptive"])
    feat = x.reshape(1, -1)                   # torch.flatten(x, 1): C,H,W order
    n_fc = len(fcs)
    for li, (w, b) in enumerate(fcs):         # dropout skipped (inference)
        last = (li == n_fc - 1)
        if last:
            feat = feat.astype(jnp.float32)   # final logits layer stays f32
        feat = matmul_bias_act(feat, w, b, relu=not last,
                               out_dtype=jnp.float32 if last else jnp.bfloat16)
    return feat[0]


# ----------------------------------------------------------------------------
# SelectiveSearch module mirror.
# ----------------------------------------------------------------------------
class SelectiveSearchPallas:
    def __init__(self, cfg=ALEXNET_FULL_CFG):
        self.cfg = cfg
        self.resize_size = cfg["resize"]
        self._fwd_cache = {}

    def _get_batched_fwd(self, height, width):
        """Batched (vmapped) region forward for one crop size: all regions of
        that size run as ONE dispatch with stacked per-region weights."""
        key = (height, width)
        if key not in self._fwd_cache:
            cfg = self.cfg
            rh, rw = cfg["resize"]

            def one(params, image, top, left):
                # transforms.functional.crop(image, top, left, height, width)
                cropped = lax.dynamic_slice(image, (0, top, left),
                                            (3, height, width))
                resized = resize_bilinear(cropped, rh, rw)        # self.resize
                logits = cnn_forward(params, resized, cfg)
                return jnp.argmax(logits)                # np.argmax(alexnet(...))

            self._fwd_cache[key] = jax.jit(jax.vmap(one))
        return self._fwd_cache[key]

    def init_params(self, images):
        # TODO(synk): Felzenszwalb/selective-search graph segmentation is a
        # data-dependent CPU algorithm with no Pallas equivalent; region
        # proposals and the per-pixel label channel are synthesized
        # deterministically here instead.
        self.alexnet = []
        self.labeled_images = []
        self.image_regions = []
        self.predictions = []
        N, C, H, W = images.shape
        base_key = jax.random.PRNGKey(42)
        for i in range(N):
            image = images[i]
            # synthetic "labeled image": [R, G, B, label] with quadrant labels
            yy = (jnp.arange(H) >= H // 2).astype(jnp.float32)
            xx = (jnp.arange(W) >= W // 2).astype(jnp.float32)
            label_ch = (yy[:, None] * 2.0 + xx[None, :])[None]
            self.labeled_images.append(jnp.concatenate([image, label_ch], axis=0))

            # synthetic region proposals, rect = (left, top, width, height);
            # sizes shared across images so each shape compiles once.
            regions = [
                {"rect": (2, 1, 24, 24), "labels": [0]},
                {"rect": (W - 36, H - 44, 32, 40), "labels": [1]},
            ]
            self.image_regions.append(regions)
            self.alexnet.append([])
            self.predictions.append([])
            for j, square in enumerate(regions):
                if len(square["labels"]) == 1:
                    key = jax.random.fold_in(base_key, i * 100 + j)
                    self.alexnet[i].append(init_alexnet_params(key, self.cfg))
                    self.predictions[i].append(0)

    def forward(self, images):
        # Group (image, region) pairs by crop size so every distinct shape is
        # one batched dispatch instead of a Python-loop of per-region calls.
        groups = {}
        for i in range(images.shape[0]):
            for j, square in enumerate(self.image_regions[i]):
                if len(square["labels"]) == 1:
                    left, top, width, height = square["rect"]
                    groups.setdefault((height, width), []).append((i, j, top, left))

        for (height, width), items in groups.items():
            fwd = self._get_batched_fwd(height, width)
            params = jax.tree_util.tree_map(
                lambda *xs: jnp.stack(xs),
                *[self.alexnet[i][j] for (i, j, _, _) in items])
            imgs = jnp.stack([images[i] for (i, _, _, _) in items])
            tops = jnp.asarray([t for (_, _, t, _) in items], jnp.int32)
            lefts = jnp.asarray([l for (_, _, _, l) in items], jnp.int32)
            preds = fwd(params, imgs, tops, lefts)
            for (i, j, _, _), p in zip(items, list(preds)):
                self.predictions[i][j] = p
        return self.labeled_images, self.predictions


# ----------------------------------------------------------------------------
# Small self-checks that exercise the whole-VMEM, tiled multi-k and GEMV
# weight-streaming GEMM paths against an XLA reference.
# ----------------------------------------------------------------------------
def _self_test_gemm():
    k1, k2, k3, k4, k5, k6 = jax.random.split(jax.random.PRNGKey(1), 6)

    def check(a, b, bias, relu, bias_on_rows):
        out = matmul_bias_act(a.astype(jnp.bfloat16), b.astype(jnp.bfloat16),
                              bias, relu=relu, bias_on_rows=bias_on_rows)
        af = a.astype(jnp.bfloat16).astype(jnp.float32)
        bf = b.astype(jnp.bfloat16).astype(jnp.float32)
        ref = af @ bf + (bias[:, None] if bias_on_rows else bias[None, :])
        if relu:
            ref = jnp.maximum(ref, 0.0)
        err = float(jnp.max(jnp.abs(out - ref)))
        scale = float(jnp.max(jnp.abs(ref))) + 1e-6
        assert err <= 0.02 * scale, f"GEMM mismatch: err={err} scale={scale}"

    # whole-VMEM single-shot path (conv-shaped, ragged K/N, per-row bias)
    check(jax.random.normal(k1, (16, 363), jnp.float32),
          jax.random.normal(k2, (363, 225), jnp.float32),
          0.1 * jax.random.normal(k3, (16,), jnp.float32), True, True)
    # tiled multi-k path
    check(jax.random.normal(k1, (384, 2048), jnp.float32),
          jax.random.normal(k2, (2048, 2048), jnp.float32),
          0.1 * jax.random.normal(k4, (2048,), jnp.float32), True, False)
    # GEMV weight-streaming path (full-config FC shape)
    check(jax.random.normal(k5, (1, 4096), jnp.float32),
          jax.random.normal(k6, (4096, 2048), jnp.float32),
          jnp.zeros((2048,), jnp.float32), False, False)


if __name__ == "__main__":
    _self_test_gemm()

    key = jax.random.PRNGKey(0)
    images = jax.random.uniform(key, (2, 3, 64, 64), dtype=jnp.float32)

    # Small demo config (same topology as torchvision AlexNet, scaled down)
    # keeps the run fast; pass ALEXNET_FULL_CFG for real torchvision sizes.
    model = SelectiveSearchPallas(ALEXNET_TINY_CFG)
    model.init_params(images)
    labeled_images, predictions = model.forward(images)

    jax.block_until_ready(labeled_images)
    jax.block_until_ready(predictions)
    print("KERNEL_OK")
</pallas_src>

<mosaic_0001>
module attributes {stable_mosaic.version = 11 : i64} {
  func.func @_gemm_bias_act_kernel(%arg0: memref<16x363xbf16, #tpu.memory_space<vmem>>, %arg1: memref<363x225xbf16, #tpu.memory_space<vmem>>, %arg2: memref<16x1xf32, #tpu.memory_space<vmem>>, %arg3: memref<16x225xf32, #tpu.memory_space<vmem>>) attributes {dimension_semantics = [], scalar_prefetch = 0 : i64, scratch_operands = 0 : i64, tpu.core_type = #tpu.core_type<tc>} {
    %c0 = arith.constant 0 : index
    %c0_0 = arith.constant 0 : index
    %0 = vector.load %arg0[%c0, %c0_0] : memref<16x363xbf16, #tpu.memory_space<vmem>>, vector<16x363xbf16>
    %c0_1 = arith.constant 0 : index
    %c0_2 = arith.constant 0 : index
    %1 = vector.load %arg1[%c0_1, %c0_2] : memref<363x225xbf16, #tpu.memory_space<vmem>>, vector<363x225xbf16>
    %cst = arith.constant dense<0.000000e+00> : vector<16x225xf32>
    %2 = tpu.matmul %0, %1, %cst {dimension_numbers = #tpu.dot_dimension_numbers<[1], [0], [0], [1], [0, 0, 1, 1], [], []>} : vector<16x363xbf16>, vector<363x225xbf16>, vector<16x225xf32> -> vector<16x225xf32>
    %c0_3 = arith.constant 0 : index
    %c0_4 = arith.constant 0 : index
    %3 = vector.load %arg2[%c0_3, %c0_4] : memref<16x1xf32, #tpu.memory_space<vmem>>, vector<16x1xf32>
    %4 = vector.broadcast %3 : vector<16x1xf32> to vector<16x225xf32>
    %5 = arith.addf %2, %4 : vector<16x225xf32>
    %cst_5 = arith.constant 0.000000e+00 : f32
    %6 = vector.broadcast %cst_5 : f32 to vector<16x225xf32>
    %7 = arith.maximumf %5, %6 : vector<16x225xf32>
    %c0_6 = arith.constant 0 : index
    %c0_7 = arith.constant 0 : index
    %8 = vector.load %arg3[%c0_6, %c0_7] : memref<16x225xf32, #tpu.memory_space<vmem>>, vector<16x225xf32>
    tpu.vector_store %arg3[%c0_6, %c0_7], %7 {strides = array<i32>} : memref<16x225xf32, #tpu.memory_space<vmem>>, vector<16x225xf32>,
    return
  }
}

</mosaic_0001>

<llo_original>
// kernel: tpu_custom_call.1
$region0: #{tpu_custom_call.1}
  #allocation0 [shape = 'u32[]', space=smem, size = 0x4, offset = 0x4, fixed_abs, tag = 'smem constant byte address 0x4 - core index']
  #allocation1 [shape = 'u32[144,128]{1,0:T(1,128)}', space=vmem, size = 0x12000, scoped, tag = 'internal scratch']
  %s0 = inlined_call_operand.vmem [shape: bf16[16,363], index: 0, kind: input, shape index: {}]
  %s1 = inlined_call_operand.vmem [shape: bf16[363,225], index: 1, kind: input, shape index: {}]
  %s2 = inlined_call_operand.vmem [shape: f32[16,1], index: 2, kind: input, shape index: {}]
  %s3 = inlined_call_operand.hbm [shape: f32[16,225], index: 3, kind: output, shape index: {}]
  %s4 = sld [smem:[#allocation0]]
  $region22: #{tpu_custom_call.1} parent=0
    _
  %s6 = ssub.s32 1, %s4
  %s7 = scalar_select 0, %s6, %s4
  $region1: #{tpu_custom_call.1} parent=0
    #allocation2 [shape = 'u8[16384]{0}', space=vmem, size = 0x4000, scoped, tag = 'output window, operand 0, single buffered']
    #allocation3 [shape = 's32[1]{0}', space=sflag, size = 0x4, scoped, tag = 'scoped memory for tpu_custom_call.1']
    %8 = vsyncpa [#allocation3], 0
    // Predicated region
    $region2: #{tpu_custom_call.1} parent=1 // pred_check
      _
    $region3: #{tpu_custom_call.1} parent=1 // pred_check_branch
      %10 = sbr.rel (0) target = $region5
    $region4: #{tpu_custom_call.1} parent=1 // pred_region
      _
    $region5: #{tpu_custom_call.1} parent=1 // pred_fallthru
      _
    // Predicated region
    $region6: #{tpu_custom_call.1} parent=1 // pred_check
      _
    $region7: #{tpu_custom_call.1} parent=1 // pred_check_branch
      %12 = sbr.rel (0) target = $region9
    $region8: #{tpu_custom_call.1} parent=1 // pred_region
      _
    $region9: #{tpu_custom_call.1} parent=1 // pred_fallthru
      _
    // Predicated region
    $region10: #{tpu_custom_call.1} parent=1 // pred_check
      _
    $region11: #{tpu_custom_call.1} parent=1 // pred_check_branch
      %14 = sbr.rel (0) target = $region13
    $region12: #{tpu_custom_call.1} parent=1 // pred_region
      _
    $region13: #{tpu_custom_call.1} parent=1 // pred_fallthru
      _
    %v16 = vld [vmem:[%s0] sm:$0xff]
    %v17 = vld [vmem:[%s0 + $0x8] sm:$0xf]
    %v18 = vld [vmem:[%s0 + $0xc] sm:$0xff]
    %v19 = vld [vmem:[%s0 + $0x14] sm:$0xf]
    %v20 = vld [vmem:[%s1] sm:$0xff]
    %v21 = vld [vmem:[%s1 + $0x8] sm:$0xff]
    %v22 = vld [vmem:[%s1 + $0x10] sm:$0xff]
    %v23 = vld [vmem:[%s1 + $0x18] sm:$0xff]
    %v24 = vld [vmem:[%s1 + $0x20] sm:$0xff]
    %v25 = vld [vmem:[%s1 + $0x28] sm:$0xff]
    %v26 = vld [vmem:[%s1 + $0x30] sm:$0xff]
    %v27 = vld [vmem:[%s1 + $0x38] sm:$0xff]
    %v28 = vld [vmem:[%s1 + $0x40] sm:$0xff]
    %v29 = vld [vmem:[%s1 + $0x48] sm:$0xff]
    %v30 = vld [vmem:[%s1 + $0x50] sm:$0xff]
    %v31 = vld [vmem:[%s1 + $0x58] sm:$0xff]
    %v32 = vld [vmem:[%s1 + $0x60] sm:$0xff]
    %v33 = vld [vmem:[%s1 + $0x68] sm:$0xff]
    %v34 = vld [vmem:[%s1 + $0x70] sm:$0xff]
    %v35 = vld [vmem:[%s1 + $0x78] sm:$0xff]
    %v36 = vld [vmem:[%s1 + $0x80] sm:$0xff]
    %v37 = vld [vmem:[%s1 + $0x88] sm:$0xff]
    %v38 = vld [vmem:[%s1 + $0x90] sm:$0xff]
    %v39 = vld [vmem:[%s1 + $0x98] sm:$0xff]
    %v40 = vld [vmem:[%s1 + $0xa0] sm:$0xff]
    %v41 = vld [vmem:[%s1 + $0xa8] sm:$0xff]
    %v42 = vld [vmem:[%s1 + $0xb0] sm:$0xff]
    %v43 = vld [vmem:[%s1 + $0xb8] sm:$0xff]
    %v44 = vld [vmem:[%s1 + $0xc0] sm:$0xff]
    %v45 = vld [vmem:[%s1 + $0xc8] sm:$0xff]
    %v46 = vld [vmem:[%s1 + $0xd0] sm:$0xff]
    %v47 = vld [vmem:[%s1 + $0xd8] sm:$0xff]
    %v48 = vld [vmem:[%s1 + $0xe0] sm:$0xff]
    %v49 = vld [vmem:[%s1 + $0xe8] sm:$0xff]
    %v50 = vld [vmem:[%s1 + $0xf0] sm:$0xff]
    %v51 = vld [vmem:[%s1 + $0xf8] sm:$0xff]
    %v52 = vld [vmem:[%s1 + $0x100] sm:$0xff]
    %v53 = vld [vmem:[%s1 + $0x108] sm:$0xff]
    %v54 = vld [vmem:[%s1 + $0x110] sm:$0xff]
    %v55 = vld [vmem:[%s1 + $0x118] sm:$0xff]
    %v56 = vld [vmem:[%s1 + $0x120] sm:$0xff]
    %v57 = vld [vmem:[%s1 + $0x128] sm:$0xff]
    %v58 = vld [vmem:[%s1 + $0x130] sm:$0xff]
    %v59 = vld [vmem:[%s1 + $0x138] sm:$0xff]
    %v60 = vld [vmem:[%s1 + $0x140] sm:$0xff]
    %v61 = vld [vmem:[%s1 + $0x148] sm:$0xff]
    %v62 = vld [vmem:[%s1 + $0x150] sm:$0xff]
    %v63 = vld [vmem:[%s1 + $0x158] sm:$0xff]
    %v64 = vld [vmem:[%s1 + $0x160] sm:$0xff]
    %v65 = vld [vmem:[%s1 + $0x168] sm:$0x33]
    %v66 = vld [vmem:[%s2] sm:$0xff]
    %v67 = vld [vmem:[%s2 + $0x8] sm:$0xff]
    %69 = vset.pattern.permute.xlu0 0
    %70 = vperm.xlu0 %69, %v66
    %v71 = vpop.permute.xlu0 %70
    %74 = vset.pattern.permute.xlu0 0
    %75 = vperm.xlu0 %74, %v67
    %v76 = vpop.permute.xlu0 %75
    %v82 = vunpack.c.l.b16 %v16
    %v83 = vunpack.c.h.b16 %v16
    %v84 = vunpack.c.l.b16 %v17
    %v85 = vunpack.c.l.b16 %v18
    %v86 = vunpack.c.h.b16 %v18
    %v87 = vunpack.c.l.b16 %v19
    %v88 = vpack.c.b16 %v85, %v82
    %v89 = vpack.c.b16 %v86, %v83
    %v90 = vpack.c.b16 %v87, %v84
    %v139 = vunpack.c.l.b16 %v20
    %v140 = vunpack.c.h.b16 %v20
    %v141 = vunpack.c.l.b16 %v21
    %v142 = vunpack.c.h.b16 %v21
    %v143 = vunpack.c.l.b16 %v22
    %v144 = vunpack.c.h.b16 %v22
    %v145 = vunpack.c.l.b16 %v23
    %v146 = vunpack.c.h.b16 %v23
    %v147 = vunpack.c.l.b16 %v24
    %v148 = vunpack.c.h.b16 %v24
    %v149 = vunpack.c.l.b16 %v25
    %v150 = vunpack.c.h.b16 %v25
    %v151 = vunpack.c.l.b16 %v26
    %v152 = vunpack.c.h.b16 %v26
    %v153 = vunpack.c.l.b16 %v27
    %v154 = vunpack.c.h.b16 %v27
    %v155 = vunpack.c.l.b16 %v28
    %v156 = vunpack.c.h.b16 %v28
    %v157 = vunpack.c.l.b16 %v29
    %v158 = vunpack.c.h.b16 %v29
    %v159 = vunpack.c.l.b16 %v30
    %v160 = vunpack.c.h.b16 %v30
    %v161 = vunpack.c.l.b16 %v31
    %v162 = vunpack.c.h.b16 %v31
    %v163 = vunpack.c.l.b16 %v32
    %v164 = vunpack.c.h.b16 %v32
    %v165 = vunpack.c.l.b16 %v33
    %v166 = vunpack.c.h.b16 %v33
    %v167 = vunpack.c.l.b16 %v34
    %v168 = vunpack.c.h.b16 %v34
    %v169 = vunpack.c.l.b16 %v35
    %v170 = vunpack.c.h.b16 %v35
    %v171 = vunpack.c.l.b16 %v36
    %v172 = vunpack.c.h.b16 %v36
    %v173 = vunpack.c.l.b16 %v37
    %v174 = vunpack.c.h.b16 %v37
    %v175 = vunpack.c.l.b16 %v38
    %v176 = vunpack.c.h.b16 %v38
    %v177 = vunpack.c.l.b16 %v39
    %v178 = vunpack.c.h.b16 %v39
    %v179 = vunpack.c.l.b16 %v40
    %v180 = vunpack.c.h.b16 %v40
    %v181 = vunpack.c.l.b16 %v41
    %v182 = vunpack.c.h.b16 %v41
    %v183 = vunpack.c.l.b16 %v42
    %v184 = vunpack.c.h.b16 %v42
    %v185 = vunpack.c.l.b16 %v43
    %v186 = vunpack.c.h.b16 %v43
    %v187 = vunpack.c.l.b16 %v44
    %v188 = vunpack.c.h.b16 %v44
    %v189 = vunpack.c.l.b16 %v45
    %v190 = vunpack.c.h.b16 %v45
    %v191 = vunpack.c.l.b16 %v46
    %v192 = vunpack.c.h.b16 %v46
    %v193 = vunpack.c.l.b16 %v47
    %v194 = vunpack.c.h.b16 %v47
    %v195 = vunpack.c.l.b16 %v48
    %v196 = vunpack.c.h.b16 %v48
    %v197 = vunpack.c.l.b16 %v49
    %v198 = vunpack.c.h.b16 %v49
    %v199 = vunpack.c.l.b16 %v50
    %v200 = vunpack.c.h.b16 %v50
    %v201 = vunpack.c.l.b16 %v51
    %v202 = vunpack.c.h.b16 %v51
    %v203 = vunpack.c.l.b16 %v52
    %v204 = vunpack.c.h.b16 %v52
    %v205 = vunpack.c.l.b16 %v53
    %v206 = vunpack.c.h.b16 %v53
    %v207 = vunpack.c.l.b16 %v54
    %v208 = vunpack.c.h.b16 %v54
    %v209 = vunpack.c.l.b16 %v55
    %v210 = vunpack.c.h.b16 %v55
    %v211 = vunpack.c.l.b16 %v56
    %v212 = vunpack.c.h.b16 %v56
    %v213 = vunpack.c.l.b16 %v57
    %v214 = vunpack.c.h.b16 %v57
    %v215 = vunpack.c.l.b16 %v58
    %v216 = vunpack.c.h.b16 %v58
    %v217 = vunpack.c.l.b16 %v59
    %v218 = vunpack.c.h.b16 %v59
    %v219 = vunpack.c.l.b16 %v60
    %v220 = vunpack.c.h.b16 %v60
    %v221 = vunpack.c.l.b16 %v61
    %v222 = vunpack.c.h.b16 %v61
    %v223 = vunpack.c.l.b16 %v62
    %v224 = vunpack.c.h.b16 %v62
    %v225 = vunpack.c.l.b16 %v63
    %v226 = vunpack.c.h.b16 %v63
    %v227 = vunpack.c.l.b16 %v64
    %v228 = vunpack.c.h.b16 %v64
    %v229 = vunpack.c.l.b16 %v65
    %v230 = vunpack.c.h.b16 %v65
    %v231 = vpack.c.b16 %v141, %v139
    %v232 = vpack.c.b16 %v142, %v140
    %v233 = vpack.c.b16 %v145, %v143
    %v234 = vpack.c.b16 %v146, %v144
    %v235 = vpack.c.b16 %v149, %v147
    %v236 = vpack.c.b16 %v150, %v148
    %v237 = vpack.c.b16 %v153, %v151
    %v238 = vpack.c.b16 %v154, %v152
    %v239 = vpack.c.b16 %v157, %v155
    %v240 = vpack.c.b16 %v158, %v156
    %v241 = vpack.c.b16 %v161, %v159
    %v242 = vpack.c.b16 %v162, %v160
    %v243 = vpack.c.b16 %v165, %v163
    %v244 = vpack.c.b16 %v166, %v164
    %v245 = vpack.c.b16 %v169, %v167
    %v246 = vpack.c.b16 %v170, %v168
    %v247 = vpack.c.b16 %v173, %v171
    %v248 = vpack.c.b16 %v174, %v172
    %v249 = vpack.c.b16 %v177, %v175
    %v250 = vpack.c.b16 %v178, %v176
    %v251 = vpack.c.b16 %v181, %v179
    %v252 = vpack.c.b16 %v182, %v180
    %v253 = vpack.c.b16 %v185, %v183
    %v254 = vpack.c.b16 %v186, %v184
    %v255 = vpack.c.b16 %v189, %v187
    %v256 = vpack.c.b16 %v190, %v188
    %v257 = vpack.c.b16 %v193, %v191
    %v258 = vpack.c.b16 %v194, %v192
    %v259 = vpack.c.b16 %v197, %v195
    %v260 = vpack.c.b16 %v198, %v196
    %v261 = vpack.c.b16 %v201, %v199
    %v262 = vpack.c.b16 %v202, %v200
    %v263 = vpack.c.b16 %v205, %v203
    %v264 = vpack.c.b16 %v206, %v204
    %v265 = vpack.c.b16 %v209, %v207
    %v266 = vpack.c.b16 %v210, %v208
    %v267 = vpack.c.b16 %v213, %v211
    %v268 = vpack.c.b16 %v214, %v212
    %v269 = vpack.c.b16 %v217, %v215
    %v270 = vpack.c.b16 %v218, %v216
    %v271 = vpack.c.b16 %v221, %v219
    %v272 = vpack.c.b16 %v222, %v220
    %v273 = vpack.c.b16 %v225, %v223
    %v274 = vpack.c.b16 %v226, %v224
    %v275 = vpack.c.b16 %v229, %v227
    %v276 = vpack.c.b16 %v230, %v228
    %vm321 = vcmask 875520
    %v323 = vsel %vm321, %v90, 0
    %vm325 = vcmask 1044480
    %vm326 = vcmask 1045504
    %v327 = vsel %vm325, 4294967295, 65535
    %v328 = vsel %vm326, %v327, 0
    %v330 = vand.u32 %v275, %v328
    %v333 = vand.u32 %v276, %v328
    %335 = vmatprep.subr.bf16.mxu0 %v232
    %336 = vmatpush1.bf16.msra.mxu0 %v231
    %337 = vmatprep.subr.bf16.mxu0 %v234
    %338 = vmatpush1.bf16.msra.mxu0 %v233
    %339 = vmatprep.subr.bf16.mxu0 %v236
    %340 = vmatpush1.bf16.msra.mxu0 %v235
    %341 = vmatprep.subr.bf16.mxu0 %v238
    %342 = vmatpush1.bf16.msra.mxu0 %v237
    %343 = vmatprep.subr.bf16.mxu0 %v240
    %344 = vmatpush1.bf16.msra.mxu0 %v239
    %345 = vmatprep.subr.bf16.mxu0 %v242
    %346 = vmatpush1.bf16.msra.mxu0 %v241
    %347 = vmatprep.subr.bf16.mxu0 %v244
    %348 = vmatpush1.bf16.msra.mxu0 %v243
    %349 = vmatprep.subr.bf16.mxu0 %v246
    %350 = vmatpush1.bf16.msra.mxu0 %v245
    %351 = vmatprep.subr.bf16.mxu0 %v248
    %352 = vmatpush1.bf16.msra.mxu0 %v247
    %353 = vmatprep.subr.bf16.mxu0 %v250
    %354 = vmatpush1.bf16.msra.mxu0 %v249
    %355 = vmatprep.subr.bf16.mxu0 %v252
    %356 = vmatpush1.bf16.msra.mxu0 %v251
    %357 = vmatprep.subr.bf16.mxu0 %v254
    %358 = vmatpush1.bf16.msra.mxu0 %v253
    %359 = vmatprep.subr.bf16.mxu0 %v256
    %360 = vmatpush1.bf16.msra.mxu0 %v255
    %361 = vmatprep.subr.bf16.mxu0 %v258
    %362 = vmatpush1.bf16.msra.mxu0 %v257
    %363 = vmatprep.subr.bf16.mxu0 %v260
    %364 = vmatpush1.bf16.msra.mxu0 %v259
    %365 = vmatprep.subr.bf16.mxu0 %v262
    %366 = vmatpush1.bf16.msra.mxu0 %v261
    %367 = vmatprep.mubr.bf16.mxu0 %v89
    %368 = vmatmul.mubr.bf16.gmra.mrb[0].mxu0 %v88
    %v369 = vpop.f32.mrb[0].mxu0
    %v370 = vadd.f32 %v71, %v369
    %v371 = vpop.f32.mrb[0].mxu0
    %v372 = vadd.f32 %v71, %v371
    %v373 = vpop.f32.mrb[0].mxu0
    %v374 = vadd.f32 %v76, %v373
    %v375 = vpop.f32.mrb[0].mxu0
    %v376 = vadd.f32 %v76, %v375
    %377 = vdwg.mxu0
    %378 = vmatprep.subr.bf16.mxu0 %v264
    %379 = vmatpush1.bf16.msra.mxu0 %v263
    %380 = vmatprep.subr.bf16.mxu0 %v266
    %381 = vmatpush1.bf16.msra.mxu0 %v265
    %382 = vmatprep.subr.bf16.mxu0 %v268
    %383 = vmatpush1.bf16.msra.mxu0 %v267
    %384 = vmatprep.subr.bf16.mxu0 %v270
    %385 = vmatpush1.bf16.msra.mxu0 %v269
    %386 = vmatprep.subr.bf16.mxu0 %v272
    %387 = vmatpush1.bf16.msra.mxu0 %v271
    %388 = vmatprep.subr.bf16.mxu0 %v274
    %389 = vmatpush1.bf16.msra.mxu0 %v273
    %390 = vmatprep.subr.bf16.mxu0 %v333
    %391 = vmatpush1.bf16.msra.mxu0 %v330
    %392 = vmatprep.subr.bf16.mxu0 0
    %393 = vmatpush1.bf16.msra.mxu0 0
    %394 = vmatprep.subr.bf16.mxu0 0
    %395 = vmatpush1.bf16.msra.mxu0 0
    %396 = vmatprep.subr.bf16.mxu0 0
    %397 = vmatpush1.bf16.msra.mxu0 0
    %398 = vmatprep.subr.bf16.mxu0 0
    %399 = vmatpush1.bf16.msra.mxu0 0
    %400 = vmatprep.subr.bf16.mxu0 0
    %401 = vmatpush1.bf16.msra.mxu0 0
    %402 = vmatprep.subr.bf16.mxu0 0
    %403 = vmatpush1.bf16.msra.mxu0 0
    %404 = vmatprep.subr.bf16.mxu0 0
    %405 = vmatpush1.bf16.msra.mxu0 0
    %406 = vmatprep.subr.bf16.mxu0 0
    %407 = vmatpush1.bf16.msra.mxu0 0
    %408 = vmatprep.subr.bf16.mxu0 0
    %409 = vmatpush1.bf16.msra.mxu0 0
    %410 = vmatprep.mubr.bf16.mxu0 0
    %411 = vmatmul.mubr.bf16.gmra.mrb[0].mxu0 %v323
    %v412 = vpop.f32.mrb[0].mxu0
    %v413 = vadd.f32 %v370, %v412
    %v414 = vpop.f32.mrb[0].mxu0
    %v415 = vadd.f32 %v372, %v414
    %v416 = vpop.f32.mrb[0].mxu0
    %v417 = vadd.f32 %v374, %v416
    %v418 = vpop.f32.mrb[0].mxu0
    %v419 = vadd.f32 %v376, %v418
    %420 = vdwg.mxu0
    %v421 = vmax.f32 %v413, 0.0
    %v422 = vmax.f32 %v415, 0.0
    %v423 = vmax.f32 %v417, 0.0
    %v424 = vmax.f32 %v419, 0.0
    %425 = vst [vmem:[#allocation2] sm:$0xff] %v421
    %vm426 = vcmask 793600
    %427 = vst.msk [vmem:[#allocation2 + $0x8] sm:$0xff] %vm426, %v422
    %428 = vst [vmem:[#allocation2 + $0x10] sm:$0xff] %v423
    %429 = vst.msk [vmem:[#allocation2 + $0x18] sm:$0xff] %vm426, %v424
    // Predicated region
    $region14: #{tpu_custom_call.1} parent=1 // pred_check
      _
    $region15: #{tpu_custom_call.1} parent=1 // pred_check_branch
      %431 = sbr.rel (0) target = $region17
    $region16: #{tpu_custom_call.1} parent=1 // pred_region
      %s433 = ssub.s32 512, 512
      %434 = vsyncadd [#allocation3], %s433
      %s435 = sshll.u32 [#allocation2], 4
      %s436 = int_to_ptr.vmem [resolvable:$true] %s435
      %441 = dma.vmem_to_hbm [thread:$0]  %s436, 512, %s3, [#allocation3], 256, 256, 16
    $region17: #{tpu_custom_call.1} parent=1 // pred_fallthru
      _
    // Predicated region
    $region18: #{tpu_custom_call.1} parent=1 // pred_check
      _
    $region19: #{tpu_custom_call.1} parent=1 // pred_check_branch
      %443 = sbr.rel (0) target = $region21
    $region20: #{tpu_custom_call.1} parent=1 // pred_region
      %444 = dma.done [#allocation3], 512
    $region21: #{tpu_custom_call.1} parent=1 // pred_fallthru
      _
    %445 = vsyncpa [#allocation3], 1

</llo_original>
